<compile_context>
chip_gen: v5e
topology: v5e:2x2
jax: 0.10.0
libtpu: 0.0.40
codegen_flags: <defaults>
</compile_context>

<pallas_src>
import functools

import jax
import jax.numpy as jnp
from jax.experimental import pallas as pl
from jax.experimental.pallas import tpu as pltpu

LANE = 128  # TPU lane width; pad feature dims to multiples of this.


def _round_up(x, m):
    return (x + m - 1) // m * m


def _pad2d(x, rows, cols):
    r, c = x.shape
    return jnp.pad(x, ((0, rows - r), (0, cols - c)))


def _vmem_limit_bytes():
    """Scoped-VMEM limit: ~75% of physical capacity (chip-aware), capped."""
    try:
        cap = int(pltpu.get_tpu_info().vmem_capacity_bytes)
    except Exception:
        cap = 64 * 1024 * 1024  # conservative fallback, safe on all chips
    return int(min(cap * 3 // 4, 112 * 1024 * 1024))


def _pick_tiles(n_p, vmem_limit):
    """Decoupled row tile tm and contraction tile tk, VMEM-budgeted."""
    tm = max(c for c in (1024, 512, 256, 128) if n_p % c == 0)
    # A-tile budget: big enough to amortize per-grid-step overhead, small
    # enough that the double-buffered bf16 tile stays well inside VMEM
    # (~12 MiB budget on 128 MiB chips, ~6 MiB on v7x's 64 MiB).
    budget = max(2 * 2**20, vmem_limit // 8)
    tk = 128
    for c in sorted({n_p, 4096, 2048, 1024, 512, 256, 128}, reverse=True):
        if n_p % c == 0 and tm * c * 2 <= budget:
            tk = c
            break
    return tm, tk


def _fused_fits(n_p, f_common, n_layers, vmem_limit):
    """Whole-stack-in-VMEM gate (assumes inputs may be double-buffered)."""
    a_b = 2 * n_p * n_p
    h_b = 2 * n_p * f_common
    w_b = 2 * n_layers * f_common * f_common
    b_b = 4 * n_layers * f_common
    out_b = 4 * n_p * f_common
    inter_b = 3 * 4 * n_p * f_common  # f32 temporaries inside the kernel
    need = 2 * (a_b + h_b + w_b + b_b + out_b) + inter_b
    return need <= int(vmem_limit * 0.7)


# ---------------------------------------------------------------------------
# First-layer projection kernel: HW_0 = H_0 @ W_0 (tiled over rows).
# ---------------------------------------------------------------------------
def _project_kernel(h_ref, w_ref, o_ref):
    o_ref[...] = jnp.dot(
        h_ref[...], w_ref[...], preferred_element_type=jnp.float32
    ).astype(o_ref.dtype)


def _project(h_bf16, w_bf16, *, tm, vmem_limit):
    n_p, f_in = h_bf16.shape
    f_out = w_bf16.shape[1]
    # Shrink the row tile if a wide f_in would overflow VMEM.
    while tm > 128 and (
        2 * tm * f_in * 2 + 2 * f_in * f_out * 2 + 2 * tm * f_out * 2
    ) > int(vmem_limit * 0.8):
        tm //= 2
    return pl.pallas_call(
        _project_kernel,
        out_shape=jax.ShapeDtypeStruct((n_p, f_out), jnp.bfloat16),
        grid_spec=pltpu.PrefetchScalarGridSpec(
            num_scalar_prefetch=0,
            grid=(n_p // tm,),
            in_specs=[
                pl.BlockSpec((tm, f_in), lambda i: (i, 0)),
                pl.BlockSpec((f_in, f_out), lambda i: (0, 0)),  # W resident
            ],
            out_specs=pl.BlockSpec((tm, f_out), lambda i: (i, 0)),
        ),
        compiler_params=pltpu.CompilerParams(
            dimension_semantics=("parallel",),
            vmem_limit_bytes=vmem_limit,
        ),
    )(h_bf16, w_bf16)


# ---------------------------------------------------------------------------
# Aggregation kernel:  out = epilogue( sum_k A[i, k] @ HW[k] )
#   epilogue = (+bias [, ReLU] [, @ W_next])   -- all applied at k == last.
# A is streamed in large (tm, tk) tiles; HW / bias / W_next stay resident.
# ---------------------------------------------------------------------------
def _aggregate_kernel(a_ref, hw_ref, b_ref, *rest,
                      tk, apply_relu, fuse_next, hw_resident):
    if fuse_next:
        w_next_ref, o_ref, acc_ref = rest
    else:
        o_ref, acc_ref = rest

    k = pl.program_id(1)

    @pl.when(k == 0)
    def _():
        acc_ref[...] = jnp.zeros_like(acc_ref)

    if hw_resident:
        start = pl.multiple_of(k * tk, tk)
        hw_tile = hw_ref[pl.ds(start, tk), :]
    else:
        hw_tile = hw_ref[...]

    acc_ref[...] += jnp.dot(
        a_ref[...], hw_tile, preferred_element_type=jnp.float32
    )

    @pl.when(k == pl.num_programs(1) - 1)
    def _():
        out = acc_ref[...] + b_ref[...]          # bias: [1, F] -> broadcast
        if apply_relu:
            out = jnp.maximum(out, 0.0)
        if fuse_next:                            # fused next-layer projection
            out = jnp.dot(out.astype(jnp.bfloat16), w_next_ref[...],
                          preferred_element_type=jnp.float32)
        o_ref[...] = out.astype(o_ref.dtype)


def _aggregate(a_bf16, hw_bf16, b_f32, w_next_bf16, *,
               tm, tk, apply_relu, out_dtype, vmem_limit):
    n_p = a_bf16.shape[0]
    f_mid = hw_bf16.shape[1]
    fuse_next = w_next_bf16 is not None
    f_out = w_next_bf16.shape[1] if fuse_next else f_mid

    # Keep the full HW operand resident in VMEM whenever it fits; otherwise
    # fall back to streaming (tk, f_mid) tiles (re-fetched per row tile).
    hw_resident = (
        2 * n_p * f_mid * 2            # HW (possibly double-buffered)
        + 2 * tm * tk * 2              # A tile, double-buffered
        + 2 * tm * f_out * 4           # output tile
        + tm * f_mid * 4               # f32 accumulator
        + (2 * f_mid * f_out * 2 if fuse_next else 0)
    ) <= int(vmem_limit * 0.85)

    if hw_resident:
        hw_spec = pl.BlockSpec((n_p, f_mid), lambda i, k: (0, 0))
    else:
        hw_spec = pl.BlockSpec((tk, f_mid), lambda i, k: (k, 0))

    in_specs = [
        pl.BlockSpec((tm, tk), lambda i, k: (i, k)),       # A tile (streamed)
        hw_spec,                                           # HW
        pl.BlockSpec((1, f_mid), lambda i, k: (0, 0)),     # bias (resident)
    ]
    operands = [a_bf16, hw_bf16, b_f32]
    if fuse_next:
        in_specs.append(pl.BlockSpec((f_mid, f_out), lambda i, k: (0, 0)))
        operands.append(w_next_bf16)

    kernel = functools.partial(
        _aggregate_kernel, tk=tk, apply_relu=apply_relu,
        fuse_next=fuse_next, hw_resident=hw_resident)

    return pl.pallas_call(
        kernel,
        out_shape=jax.ShapeDtypeStruct((n_p, f_out), out_dtype),
        grid_spec=pltpu.PrefetchScalarGridSpec(
            num_scalar_prefetch=0,
            grid=(n_p // tm, n_p // tk),     # contraction axis last
            in_specs=in_specs,
            out_specs=pl.BlockSpec((tm, f_out), lambda i, k: (i, 0)),
            scratch_shapes=[pltpu.VMEM((tm, f_mid), jnp.float32)],
        ),
        compiler_params=pltpu.CompilerParams(
            dimension_semantics=("parallel", "arbitrary"),
            vmem_limit_bytes=vmem_limit,
        ),
    )(*operands)


# ---------------------------------------------------------------------------
# Fused whole-stack kernel (small/medium graphs: everything resident in VMEM,
# A_hat read from HBM exactly once for the whole layer stack).
# ---------------------------------------------------------------------------
def _fused_stack_kernel(a_ref, h_ref, w_ref, b_ref, o_ref, *, n_layers):
    a = a_ref[...]          # [Np, Np] bf16
    h = h_ref[...]          # [Np, F]  bf16
    for layer in range(n_layers):  # unrolled: n_layers is small & static
        hw = jnp.dot(h, w_ref[layer], preferred_element_type=jnp.float32)
        out = jnp.dot(
            a, hw.astype(jnp.bfloat16), preferred_element_type=jnp.float32
        ) + b_ref[layer]
        if layer < n_layers - 1:
            h = jnp.maximum(out, 0.0).astype(jnp.bfloat16)
        else:
            o_ref[...] = out.astype(o_ref.dtype)


def _forward_fused(prepared, features):
    n = prepared["n"]
    n_p = prepared["n_p"]
    f_common = prepared["f_common"]
    vmem_limit = prepared["vmem_limit"]
    w_stack = prepared["w_stack"]
    b_stack = prepared["b_stack"]
    n_layers = w_stack.shape[0]

    h_p = _pad2d(features.astype(jnp.float32), n_p, f_common)
    h_p = h_p.astype(jnp.bfloat16)

    kernel = functools.partial(_fused_stack_kernel, n_layers=n_layers)
    out = pl.pallas_call(
        kernel,
        out_shape=jax.ShapeDtypeStruct((n_p, f_common), jnp.float32),
        grid_spec=pltpu.PrefetchScalarGridSpec(
            num_scalar_prefetch=0,
            grid=(1,),
            in_specs=[
                pl.BlockSpec((n_p, n_p), lambda i: (0, 0)),
                pl.BlockSpec((n_p, f_common), lambda i: (0, 0)),
                pl.BlockSpec((n_layers, f_common, f_common),
                             lambda i: (0, 0, 0)),
                pl.BlockSpec((n_layers, 1, f_common), lambda i: (0, 0, 0)),
            ],
            out_specs=pl.BlockSpec((n_p, f_common), lambda i: (0, 0)),
        ),
        compiler_params=pltpu.CompilerParams(
            dimension_semantics=("arbitrary",),
            vmem_limit_bytes=vmem_limit,
        ),
    )(prepared["a"], h_p, w_stack, b_stack)
    return out[:n, :prepared["n_classes"]]


def _forward_tiled(prepared, features):
    n = prepared["n"]
    n_p = prepared["n_p"]
    vmem_limit = prepared["vmem_limit"]
    f_pads = prepared["f_pads"]
    w_list = prepared["w_list"]
    b_list = prepared["b_list"]
    n_layers = len(w_list)

    tm, tk = _pick_tiles(n_p, vmem_limit)

    h0 = _pad2d(features.astype(jnp.float32), n_p, f_pads[0])
    h0 = h0.astype(jnp.bfloat16)

    # Only the first layer needs a standalone projection; every other H@W is
    # fused into the previous aggregate's epilogue.
    hw = _project(h0, w_list[0], tm=tm, vmem_limit=vmem_limit)
    for layer in range(n_layers):
        # dropout (layer != 0) is identity in eval mode -- see TODO above
        last = layer == n_layers - 1
        w_next = None if last else w_list[layer + 1]
        hw = _aggregate(
            prepared["a"], hw, b_list[layer], w_next,
            tm=tm, tk=tk, apply_relu=not last,
            out_dtype=jnp.float32 if last else jnp.bfloat16,
            vmem_limit=vmem_limit,
        )
    return hw[:n, :prepared["n_classes"]]


# ---------------------------------------------------------------------------
# One-time preparation (hoisted out of the per-forward path) + dispatch.
# ---------------------------------------------------------------------------
def prepare_gcn(a_hat, params, *, feature_dim, mode="auto"):
    """Pad + cast A_hat and the weight stack ONCE; choose the execution path."""
    n = a_hat.shape[0]
    n_p = _round_up(n, LANE)
    n_layers = len(params)
    n_classes = params[-1][0].shape[1]
    vmem_limit = _vmem_limit_bytes()

    f_dims = [feature_dim] + [w.shape[1] for (w, _) in params]
    f_common = max(_round_up(d, LANE) for d in f_dims)

    if mode == "auto":
        mode = ("fused" if _fused_fits(n_p, f_common, n_layers, vmem_limit)
                else "tiled")

    a_p = _pad2d(a_hat.astype(jnp.float32), n_p, n_p).astype(jnp.bfloat16)
    prepared = dict(mode=mode, n=n, n_p=n_p, n_classes=n_classes,
                    vmem_limit=vmem_limit, a=a_p)

    if mode == "fused":
        prepared["f_common"] = f_common
        prepared["w_stack"] = jnp.stack(
            [_pad2d(w.astype(jnp.float32), f_common, f_common)
             for (w, _) in params]).astype(jnp.bfloat16)
        prepared["b_stack"] = jnp.stack(
            [jnp.pad(b.astype(jnp.float32),
                     (0, f_common - b.shape[0])).reshape(1, f_common)
             for (_, b) in params])
    else:
        f_pads = [_round_up(d, LANE) for d in f_dims]
        w_list, b_list = [], []
        for layer, (w, b) in enumerate(params):
            w_list.append(
                _pad2d(w.astype(jnp.float32),
                       f_pads[layer], f_pads[layer + 1]).astype(jnp.bfloat16))
            b_list.append(
                jnp.pad(b.astype(jnp.float32),
                        (0, f_pads[layer + 1] - b.shape[0])
                        ).reshape(1, f_pads[layer + 1]))
        prepared["f_pads"] = f_pads
        prepared["w_list"] = w_list
        prepared["b_list"] = b_list
    return prepared


def gcn_forward(prepared, features):
    """GCN.forward: stack of GraphConv layers; ReLU on all but the last."""
    if prepared["mode"] == "fused":
        return _forward_fused(prepared, features)
    return _forward_tiled(prepared, features)


# ---------------------------------------------------------------------------
# Glue: graph construction, parameters, pure-JAX reference.
# ---------------------------------------------------------------------------
def build_normalized_adjacency(key, n_nodes, edge_prob=0.15):
    """Random undirected graph + self-loops, symmetric normalization."""
    upper = jax.random.bernoulli(key, p=edge_prob, shape=(n_nodes, n_nodes))
    upper = jnp.triu(upper.astype(jnp.float32), k=1)
    adj = upper + upper.T + jnp.eye(n_nodes, dtype=jnp.float32)  # self loops
    deg = jnp.sum(adj, axis=1)
    d_inv_sqrt = 1.0 / jnp.sqrt(deg)
    a_hat = adj * d_inv_sqrt[:, None] * d_inv_sqrt[None, :]
    return a_hat.astype(jnp.float32)


def init_params(key, in_feats, n_hidden, n_classes, n_layers):
    """GraphConv weights: [in->hid] + (n_layers-1)*[hid->hid] + [hid->cls]."""
    dims = [(in_feats, n_hidden)]
    dims += [(n_hidden, n_hidden)] * (n_layers - 1)
    dims += [(n_hidden, n_classes)]
    params = []
    for fi, fo in dims:
        key, wk = jax.random.split(key)
        scale = jnp.sqrt(6.0 / (fi + fo))  # xavier_uniform-like
        w = jax.random.uniform(wk, (fi, fo), jnp.float32, -scale, scale)
        b = jnp.zeros((fo,), jnp.float32)
        params.append((w, b))
    return params


def gcn_reference(a_hat, features, params):
    """Pure-JAX f32 reference for correctness checking."""
    h = features
    n_layers = len(params)
    for i, (w, b) in enumerate(params):
        h = a_hat @ (h @ w) + b
        if i != n_layers - 1:
            h = jnp.maximum(h, 0.0)
    return h


if __name__ == "__main__":
    # Small shapes consistent with the module's forward:
    n_nodes, in_feats, n_hidden, n_classes, n_layers = 64, 32, 32, 8, 2

    root = jax.random.PRNGKey(0)
    k_graph, k_feat, k_param = jax.random.split(root, 3)

    a_hat = build_normalized_adjacency(k_graph, n_nodes)
    features = jax.random.normal(k_feat, (n_nodes, in_feats), jnp.float32)
    params = init_params(k_param, in_feats, n_hidden, n_classes, n_layers)

    # One-time preparation (A_hat pad/cast + weight padding) hoisted out of
    # the per-forward path.  "auto" picks the fused path for this toy graph;
    # the tiled path is exercised explicitly as well.
    prep_auto = prepare_gcn(a_hat, params, feature_dim=in_feats)
    prep_tiled = prepare_gcn(a_hat, params, feature_dim=in_feats, mode="tiled")

    fused_fn = jax.jit(lambda f: gcn_forward(prep_auto, f))
    tiled_fn = jax.jit(lambda f: gcn_forward(prep_tiled, f))

    out_fused = jax.block_until_ready(fused_fn(features))
    out_tiled = jax.block_until_ready(tiled_fn(features))
    ref = gcn_reference(a_hat, features, params)

    assert out_fused.shape == (n_nodes, n_classes)
    assert out_tiled.shape == (n_nodes, n_classes)
    assert jnp.all(jnp.isfinite(out_fused))
    assert jnp.all(jnp.isfinite(out_tiled))
    # Loose tolerance: streamed operands are bf16 (accumulation is f32).
    assert jnp.allclose(out_fused, ref, atol=1e-1, rtol=1e-1)
    assert jnp.allclose(out_tiled, ref, atol=1e-1, rtol=1e-1)
    print("KERNEL_OK")
</pallas_src>

<mosaic_0001>
module attributes {stable_mosaic.version = 11 : i64} {
  func.func @_fused_stack_kernel(%arg0: i32, %arg1: memref<128x128xbf16, #tpu.memory_space<vmem>>, %arg2: memref<128x128xbf16, #tpu.memory_space<vmem>>, %arg3: memref<3x128x128xbf16, #tpu.memory_space<vmem>>, %arg4: memref<3x1x128xf32, #tpu.memory_space<vmem>>, %arg5: memref<128x128xf32, #tpu.memory_space<vmem>>) attributes {dimension_semantics = [#tpu.dimension_semantics<arbitrary>], iteration_bounds = array<i64: 1>, scalar_prefetch = 0 : i64, scratch_operands = 0 : i64, tpu.core_type = #tpu.core_type<tc>, window_params = [{pipeline_mode = #tpu.pipeline_mode<synchronous>, transform_indices = @transform_0, window_bounds = array<i64: 128, 128>}, {pipeline_mode = #tpu.pipeline_mode<synchronous>, transform_indices = @transform_1, window_bounds = array<i64: 128, 128>}, {pipeline_mode = #tpu.pipeline_mode<synchronous>, transform_indices = @transform_2, window_bounds = array<i64: 3, 128, 128>}, {pipeline_mode = #tpu.pipeline_mode<synchronous>, transform_indices = @transform_3, window_bounds = array<i64: 3, 1, 128>}, {pipeline_mode = #tpu.pipeline_mode<synchronous>, transform_indices = @transform_4, window_bounds = array<i64: 128, 128>}]} {
    %c0 = arith.constant 0 : index
    %c0_0 = arith.constant 0 : index
    %0 = vector.load %arg1[%c0, %c0_0] : memref<128x128xbf16, #tpu.memory_space<vmem>>, vector<128x128xbf16>
    %c0_1 = arith.constant 0 : index
    %c0_2 = arith.constant 0 : index
    %1 = vector.load %arg2[%c0_1, %c0_2] : memref<128x128xbf16, #tpu.memory_space<vmem>>, vector<128x128xbf16>
    %c0_3 = arith.constant 0 : index
    %c0_4 = arith.constant 0 : index
    %c0_5 = arith.constant 0 : index
    %2 = vector.load %arg3[%c0_3, %c0_4, %c0_5] : memref<3x128x128xbf16, #tpu.memory_space<vmem>>, vector<1x128x128xbf16>
    %3 = vector.shape_cast %2 : vector<1x128x128xbf16> to vector<128x128xbf16>
    %cst = arith.constant dense<0.000000e+00> : vector<128x128xf32>
    %4 = tpu.matmul %1, %3, %cst {dimension_numbers = #tpu.dot_dimension_numbers<[1], [0], [0], [1], [0, 0, 1, 1], [], []>} : vector<128x128xbf16>, vector<128x128xbf16>, vector<128x128xf32> -> vector<128x128xf32>
    %5 = arith.truncf %4 : vector<128x128xf32> to vector<128x128xbf16>
    %cst_6 = arith.constant dense<0.000000e+00> : vector<128x128xf32>
    %6 = tpu.matmul %0, %5, %cst_6 {dimension_numbers = #tpu.dot_dimension_numbers<[1], [0], [0], [1], [0, 0, 1, 1], [], []>} : vector<128x128xbf16>, vector<128x128xbf16>, vector<128x128xf32> -> vector<128x128xf32>
    %c0_7 = arith.constant 0 : index
    %c0_8 = arith.constant 0 : index
    %c0_9 = arith.constant 0 : index
    %7 = vector.load %arg4[%c0_7, %c0_8, %c0_9] : memref<3x1x128xf32, #tpu.memory_space<vmem>>, vector<1x1x128xf32>
    %8 = vector.shape_cast %7 : vector<1x1x128xf32> to vector<1x128xf32>
    %9 = vector.broadcast %8 : vector<1x128xf32> to vector<128x128xf32>
    %10 = arith.addf %6, %9 : vector<128x128xf32>
    %cst_10 = arith.constant 0.000000e+00 : f32
    %11 = vector.broadcast %cst_10 : f32 to vector<128x128xf32>
    %12 = arith.maximumf %10, %11 : vector<128x128xf32>
    %13 = arith.truncf %12 : vector<128x128xf32> to vector<128x128xbf16>
    %c1 = arith.constant 1 : index
    %c0_11 = arith.constant 0 : index
    %c0_12 = arith.constant 0 : index
    %14 = vector.load %arg3[%c1, %c0_11, %c0_12] : memref<3x128x128xbf16, #tpu.memory_space<vmem>>, vector<1x128x128xbf16>
    %15 = vector.shape_cast %14 : vector<1x128x128xbf16> to vector<128x128xbf16>
    %cst_13 = arith.constant dense<0.000000e+00> : vector<128x128xf32>
    %16 = tpu.matmul %13, %15, %cst_13 {dimension_numbers = #tpu.dot_dimension_numbers<[1], [0], [0], [1], [0, 0, 1, 1], [], []>} : vector<128x128xbf16>, vector<128x128xbf16>, vector<128x128xf32> -> vector<128x128xf32>
    %17 = arith.truncf %16 : vector<128x128xf32> to vector<128x128xbf16>
    %cst_14 = arith.constant dense<0.000000e+00> : vector<128x128xf32>
    %18 = tpu.matmul %0, %17, %cst_14 {dimension_numbers = #tpu.dot_dimension_numbers<[1], [0], [0], [1], [0, 0, 1, 1], [], []>} : vector<128x128xbf16>, vector<128x128xbf16>, vector<128x128xf32> -> vector<128x128xf32>
    %c1_15 = arith.constant 1 : index
    %c0_16 = arith.constant 0 : index
    %c0_17 = arith.constant 0 : index
    %19 = vector.load %arg4[%c1_15, %c0_16, %c0_17] : memref<3x1x128xf32, #tpu.memory_space<vmem>>, vector<1x1x128xf32>
    %20 = vector.shape_cast %19 : vector<1x1x128xf32> to vector<1x128xf32>
    %21 = vector.broadcast %20 : vector<1x128xf32> to vector<128x128xf32>
    %22 = arith.addf %18, %21 : vector<128x128xf32>
    %cst_18 = arith.constant 0.000000e+00 : f32
    %23 = vector.broadcast %cst_18 : f32 to vector<128x128xf32>
    %24 = arith.maximumf %22, %23 : vector<128x128xf32>
    %25 = arith.truncf %24 : vector<128x128xf32> to vector<128x128xbf16>
    %c2 = arith.constant 2 : index
    %c0_19 = arith.constant 0 : index
    %c0_20 = arith.constant 0 : index
    %26 = vector.load %arg3[%c2, %c0_19, %c0_20] : memref<3x128x128xbf16, #tpu.memory_space<vmem>>, vector<1x128x128xbf16>
    %27 = vector.shape_cast %26 : vector<1x128x128xbf16> to vector<128x128xbf16>
    %cst_21 = arith.constant dense<0.000000e+00> : vector<128x128xf32>
    %28 = tpu.matmul %25, %27, %cst_21 {dimension_numbers = #tpu.dot_dimension_numbers<[1], [0], [0], [1], [0, 0, 1, 1], [], []>} : vector<128x128xbf16>, vector<128x128xbf16>, vector<128x128xf32> -> vector<128x128xf32>
    %29 = arith.truncf %28 : vector<128x128xf32> to vector<128x128xbf16>
    %cst_22 = arith.constant dense<0.000000e+00> : vector<128x128xf32>
    %30 = tpu.matmul %0, %29, %cst_22 {dimension_numbers = #tpu.dot_dimension_numbers<[1], [0], [0], [1], [0, 0, 1, 1], [], []>} : vector<128x128xbf16>, vector<128x128xbf16>, vector<128x128xf32> -> vector<128x128xf32>
    %c2_23 = arith.constant 2 : index
    %c0_24 = arith.constant 0 : index
    %c0_25 = arith.constant 0 : index
    %31 = vector.load %arg4[%c2_23, %c0_24, %c0_25] : memref<3x1x128xf32, #tpu.memory_space<vmem>>, vector<1x1x128xf32>
    %32 = vector.shape_cast %31 : vector<1x1x128xf32> to vector<1x128xf32>
    %33 = vector.broadcast %32 : vector<1x128xf32> to vector<128x128xf32>
    %34 = arith.addf %30, %33 : vector<128x128xf32>
    %c0_26 = arith.constant 0 : index
    %c0_27 = arith.constant 0 : index
    %35 = vector.load %arg5[%c0_26, %c0_27] : memref<128x128xf32, #tpu.memory_space<vmem>>, vector<128x128xf32>
    tpu.vector_store %arg5[%c0_26, %c0_27], %34 {strides = array<i32>} : memref<128x128xf32, #tpu.memory_space<vmem>>, vector<128x128xf32>,
    return
  }
  func.func @transform_0(%arg0: i32) -> (i32, i32) {
    %c0_i32 = arith.constant 0 : i32
    %c0_i32_0 = arith.constant 0 : i32
    %c0_i32_1 = arith.constant 0 : i32
    return %c0_i32, %c0_i32_0 : i32, i32
  }
  func.func @transform_1(%arg0: i32) -> (i32, i32) {
    %c0_i32 = arith.constant 0 : i32
    %c0_i32_0 = arith.constant 0 : i32
    %c0_i32_1 = arith.constant 0 : i32
    return %c0_i32, %c0_i32_0 : i32, i32
  }
  func.func @transform_2(%arg0: i32) -> (i32, i32, i32) {
    %c0_i32 = arith.constant 0 : i32
    %c0_i32_0 = arith.constant 0 : i32
    %c0_i32_1 = arith.constant 0 : i32
    %c0_i32_2 = arith.constant 0 : i32
    return %c0_i32, %c0_i32_0, %c0_i32_1 : i32, i32, i32
  }
  func.func @transform_3(%arg0: i32) -> (i32, i32, i32) {
    %c0_i32 = arith.constant 0 : i32
    %c0_i32_0 = arith.constant 0 : i32
    %c0_i32_1 = arith.constant 0 : i32
    %c0_i32_2 = arith.constant 0 : i32
    return %c0_i32, %c0_i32_0, %c0_i32_1 : i32, i32, i32
  }
  func.func @transform_4(%arg0: i32) -> (i32, i32) {
    %c0_i32 = arith.constant 0 : i32
    %c0_i32_0 = arith.constant 0 : i32
    %c0_i32_1 = arith.constant 0 : i32
    return %c0_i32, %c0_i32_0 : i32, i32
  }
}

</mosaic_0001>

<llo_original>
// kernel: _lambda_.1
$region0: #{_lambda_.1}
  #allocation0 [shape = 'u32[]', space=smem, size = 0x4, offset = 0x4, fixed_abs, tag = 'smem constant byte address 0x4 - core index']
  #allocation1 [shape = 'u32[72,128]{1,0:T(1,128)}', space=vmem, size = 0x9000, scoped, tag = 'internal scratch']
  %s0 = inlined_call_operand.hbm [shape: bf16[128,128], index: 0, kind: input, shape index: {}]
  %s1 = inlined_call_operand.vmem [shape: bf16[128,128], index: 1, kind: input, shape index: {}]
  %s2 = inlined_call_operand.vmem [shape: bf16[3,128,128], index: 2, kind: input, shape index: {}]
  %s3 = inlined_call_operand.vmem [shape: f32[3,1,128], index: 3, kind: input, shape index: {}]
  %s4 = inlined_call_operand.vmem [shape: f32[128,128], index: 4, kind: output, shape index: {}]
  %s5 = sld [smem:[#allocation0]]
  $region30: #{_lambda_.1} parent=0
    _
  %s7 = ssub.s32 1, %s5
  %s8 = scalar_select 0, %s7, %s5
  $region1: #{_lambda_.1} parent=0
    #allocation2 [shape = 'u8[32768]{0}', space=vmem, size = 0x8000, scoped, tag = 'input window, operand 0, single buffered']
    #allocation3 [shape = 's32[1]{0}', space=sflag, size = 0x4, scoped, tag = 'scoped memory for _lambda_.1']
    %9 = vsyncpa [#allocation3], 0
    // Predicated region
    $region2: #{_lambda_.1} parent=1 // pred_check
      _
    $region3: #{_lambda_.1} parent=1 // pred_check_branch
      %11 = sbr.rel (0) target = $region5
    $region4: #{_lambda_.1} parent=1 // pred_region
      %13 = vsyncadd [#allocation3], 0
      %s14 = sshll.u32 %s0, 4
      %s15 = int_to_ptr.hbm [resolvable:$true] %s14
      %s16 = sshll.u32 [#allocation2], 4
      %s17 = int_to_ptr.vmem [resolvable:$true] %s16
      %22 = dma.hbm_to_vmem [thread:$0]  %s15, 1024, %s17, [#allocation3], 64, 64, 4
    $region5: #{_lambda_.1} parent=1 // pred_fallthru
      _
    // Predicated region
    $region6: #{_lambda_.1} parent=1 // pred_check
      _
    $region7: #{_lambda_.1} parent=1 // pred_check_branch
      %24 = sbr.rel (0) target = $region9
    $region8: #{_lambda_.1} parent=1 // pred_region
      _
    $region9: #{_lambda_.1} parent=1 // pred_fallthru
      _
    // Predicated region
    $region10: #{_lambda_.1} parent=1 // pred_check
      _
    $region11: #{_lambda_.1} parent=1 // pred_check_branch
      %26 = sbr.rel (0) target = $region13
    $region12: #{_lambda_.1} parent=1 // pred_region
      _
    $region13: #{_lambda_.1} parent=1 // pred_fallthru
      _
    // Predicated region
    $region14: #{_lambda_.1} parent=1 // pred_check
      _
    $region15: #{_lambda_.1} parent=1 // pred_check_branch
      %28 = sbr.rel (0) target = $region17
    $region16: #{_lambda_.1} parent=1 // pred_region
      _
    $region17: #{_lambda_.1} parent=1 // pred_fallthru
      _
    // Predicated region
    $region18: #{_lambda_.1} parent=1 // pred_check
      _
    $region19: #{_lambda_.1} parent=1 // pred_check_branch
      %30 = sbr.rel (0) target = $region21
    $region20: #{_lambda_.1} parent=1 // pred_region
      %32 = dma.done [#allocation3], 1024
    $region21: #{_lambda_.1} parent=1 // pred_fallthru
      _
    %v33 = vld [vmem:[#allocation2] sm:$0xf]
    %v34 = vld [vmem:[#allocation2 + $0x4] sm:$0xf]
    %v35 = vld [vmem:[#allocation2 + $0x8] sm:$0xf]
    %v36 = vld [vmem:[#allocation2 + $0xc] sm:$0xf]
    %v37 = vld [vmem:[#allocation2 + $0x10] sm:$0xf]
    %v38 = vld [vmem:[#allocation2 + $0x14] sm:$0xf]
    %v39 = vld [vmem:[#allocation2 + $0x18] sm:$0xf]
    %v40 = vld [vmem:[#allocation2 + $0x1c] sm:$0xf]
    %v41 = vld [vmem:[#allocation2 + $0x20] sm:$0xf]
    %v42 = vld [vmem:[#allocation2 + $0x24] sm:$0xf]
    %v43 = vld [vmem:[#allocation2 + $0x28] sm:$0xf]
    %v44 = vld [vmem:[#allocation2 + $0x2c] sm:$0xf]
    %v45 = vld [vmem:[#allocation2 + $0x30] sm:$0xf]
    %v46 = vld [vmem:[#allocation2 + $0x34] sm:$0xf]
    %v47 = vld [vmem:[#allocation2 + $0x38] sm:$0xf]
    %v48 = vld [vmem:[#allocation2 + $0x3c] sm:$0xf]
    %v49 = vld [vmem:[%s1] sm:$0xf]
    %v50 = vld [vmem:[%s1 + $0x4] sm:$0xf]
    %v51 = vld [vmem:[%s1 + $0x8] sm:$0xf]
    %v52 = vld [vmem:[%s1 + $0xc] sm:$0xf]
    %v53 = vld [vmem:[%s1 + $0x10] sm:$0xf]
    %v54 = vld [vmem:[%s1 + $0x14] sm:$0xf]
    %v55 = vld [vmem:[%s1 + $0x18] sm:$0xf]
    %v56 = vld [vmem:[%s1 + $0x1c] sm:$0xf]
    %v57 = vld [vmem:[%s1 + $0x20] sm:$0xf]
    %v58 = vld [vmem:[%s1 + $0x24] sm:$0xf]
    %v59 = vld [vmem:[%s1 + $0x28] sm:$0xf]
    %v60 = vld [vmem:[%s1 + $0x2c] sm:$0xf]
    %v61 = vld [vmem:[%s1 + $0x30] sm:$0xf]
    %v62 = vld [vmem:[%s1 + $0x34] sm:$0xf]
    %v63 = vld [vmem:[%s1 + $0x38] sm:$0xf]
    %v64 = vld [vmem:[%s1 + $0x3c] sm:$0xf]
    %v65 = vld [vmem:[%s2] sm:$0xf]
    %v66 = vld [vmem:[%s2 + $0x4] sm:$0xf]
    %v67 = vld [vmem:[%s2 + $0x8] sm:$0xf]
    %v68 = vld [vmem:[%s2 + $0xc] sm:$0xf]
    %v69 = vld [vmem:[%s2 + $0x10] sm:$0xf]
    %v70 = vld [vmem:[%s2 + $0x14] sm:$0xf]
    %v71 = vld [vmem:[%s2 + $0x18] sm:$0xf]
    %v72 = vld [vmem:[%s2 + $0x1c] sm:$0xf]
    %v73 = vld [vmem:[%s2 + $0x20] sm:$0xf]
    %v74 = vld [vmem:[%s2 + $0x24] sm:$0xf]
    %v75 = vld [vmem:[%s2 + $0x28] sm:$0xf]
    %v76 = vld [vmem:[%s2 + $0x2c] sm:$0xf]
    %v77 = vld [vmem:[%s2 + $0x30] sm:$0xf]
    %v78 = vld [vmem:[%s2 + $0x34] sm:$0xf]
    %v79 = vld [vmem:[%s2 + $0x38] sm:$0xf]
    %v80 = vld [vmem:[%s2 + $0x3c] sm:$0xf]
    %v97 = vunpack.c.l.b16 %v49
    %v98 = vunpack.c.l.b16 %v50
    %v99 = vunpack.c.l.b16 %v51
    %v100 = vunpack.c.l.b16 %v52
    %v101 = vunpack.c.l.b16 %v53
    %v102 = vunpack.c.l.b16 %v54
    %v103 = vunpack.c.l.b16 %v55
    %v104 = vunpack.c.l.b16 %v56
    %v105 = vunpack.c.l.b16 %v57
    %v106 = vunpack.c.l.b16 %v58
    %v107 = vunpack.c.l.b16 %v59
    %v108 = vunpack.c.l.b16 %v60
    %v109 = vunpack.c.l.b16 %v61
    %v110 = vunpack.c.l.b16 %v62
    %v111 = vunpack.c.l.b16 %v63
    %v112 = vunpack.c.l.b16 %v64
    %v113 = vpack.c.b16 %v98, %v97
    %v114 = vpack.c.b16 %v100, %v99
    %v115 = vpack.c.b16 %v102, %v101
    %v116 = vpack.c.b16 %v104, %v103
    %v117 = vpack.c.b16 %v106, %v105
    %v118 = vpack.c.b16 %v108, %v107
    %v119 = vpack.c.b16 %v110, %v109
    %v120 = vpack.c.b16 %v112, %v111
    %v145 = vunpack.c.l.b16 %v65
    %v146 = vunpack.c.l.b16 %v66
    %v147 = vunpack.c.l.b16 %v67
    %v148 = vunpack.c.l.b16 %v68
    %v149 = vunpack.c.l.b16 %v69
    %v150 = vunpack.c.l.b16 %v70
    %v151 = vunpack.c.l.b16 %v71
    %v152 = vunpack.c.l.b16 %v72
    %v153 = vunpack.c.l.b16 %v73
    %v154 = vunpack.c.l.b16 %v74
    %v155 = vunpack.c.l.b16 %v75
    %v156 = vunpack.c.l.b16 %v76
    %v157 = vunpack.c.l.b16 %v77
    %v158 = vunpack.c.l.b16 %v78
    %v159 = vunpack.c.l.b16 %v79
    %v160 = vunpack.c.l.b16 %v80
    %v161 = vpack.c.b16 %v146, %v145
    %v162 = vpack.c.b16 %v148, %v147
    %v163 = vpack.c.b16 %v150, %v149
    %v164 = vpack.c.b16 %v152, %v151
    %v165 = vpack.c.b16 %v154, %v153
    %v166 = vpack.c.b16 %v156, %v155
    %v167 = vpack.c.b16 %v158, %v157
    %v168 = vpack.c.b16 %v160, %v159
    %177 = vmatpush.bf16.msra.mxu0 %v168
    %178 = vmatpush.bf16.msra.mxu0 %v167
    %179 = vmatpush.bf16.msra.mxu0 %v166
    %180 = vmatpush.bf16.msra.mxu0 %v165
    %181 = vmatpush.bf16.msra.mxu0 %v164
    %182 = vmatpush.bf16.msra.mxu0 %v163
    %183 = vmatpush.bf16.msra.mxu0 %v162
    %184 = vmatpush.bf16.msra.mxu0 %v161
    %185 = vmatmul.bf16.gmra.mxu0 %v113
    %v186 = vpop.f32.mrf.mxu0
    %v187 = vadd.f32 0.0, %v186
    %v188 = vpop.f32.mrf.mxu0
    %v189 = vadd.f32 0.0, %v188
    %190 = vmatmul.bf16.gmra.mxu0 %v114
    %v191 = vpop.f32.mrf.mxu0
    %v192 = vadd.f32 0.0, %v191
    %v193 = vpop.f32.mrf.mxu0
    %v194 = vadd.f32 0.0, %v193
    %195 = vmatmul.bf16.gmra.mxu0 %v115
    %v196 = vpop.f32.mrf.mxu0
    %v197 = vadd.f32 0.0, %v196
    %v198 = vpop.f32.mrf.mxu0
    %v199 = vadd.f32 0.0, %v198
    %200 = vmatmul.bf16.gmra.mxu0 %v116
    %v201 = vpop.f32.mrf.mxu0
    %v202 = vadd.f32 0.0, %v201
    %v203 = vpop.f32.mrf.mxu0
    %v204 = vadd.f32 0.0, %v203
    %205 = vmatmul.bf16.gmra.mxu0 %v117
    %v206 = vpop.f32.mrf.mxu0
    %v207 = vadd.f32 0.0, %v206
    %v208 = vpop.f32.mrf.mxu0
    %v209 = vadd.f32 0.0, %v208
    %210 = vmatmul.bf16.gmra.mxu0 %v118
    %v211 = vpop.f32.mrf.mxu0
    %v212 = vadd.f32 0.0, %v211
    %v213 = vpop.f32.mrf.mxu0
    %v214 = vadd.f32 0.0, %v213
    %215 = vmatmul.bf16.gmra.mxu0 %v119
    %v216 = vpop.f32.mrf.mxu0
    %v217 = vadd.f32 0.0, %v216
    %v218 = vpop.f32.mrf.mxu0
    %v219 = vadd.f32 0.0, %v218
    %220 = vmatmul.bf16.gmra.mxu0 %v120
    %v221 = vpop.f32.mrf.mxu0
    %v222 = vadd.f32 0.0, %v221
    %v223 = vpop.f32.mrf.mxu0
    %v224 = vadd.f32 0.0, %v223
    %225 = vdwg.mxu0
    %v226 = vpack.c.bf16 %v189, %v187
    %v227 = vpack.c.bf16 %v194, %v192
    %v228 = vpack.c.bf16 %v199, %v197
    %v229 = vpack.c.bf16 %v204, %v202
    %v230 = vpack.c.bf16 %v209, %v207
    %v231 = vpack.c.bf16 %v214, %v212
    %v232 = vpack.c.bf16 %v219, %v217
    %v233 = vpack.c.bf16 %v224, %v222
    %v234 = vld [vmem:[%s3] sm:$0x1]
    %v236 = vperm.slane %v234, 0
    %v254 = vunpack.c.l.b16 %v33
    %v255 = vunpack.c.l.b16 %v34
    %v256 = vunpack.c.l.b16 %v35
    %v257 = vunpack.c.l.b16 %v36
    %v258 = vunpack.c.l.b16 %v37
    %v259 = vunpack.c.l.b16 %v38
    %v260 = vunpack.c.l.b16 %v39
    %v261 = vunpack.c.l.b16 %v40
    %v262 = vunpack.c.l.b16 %v41
    %v263 = vunpack.c.l.b16 %v42
    %v264 = vunpack.c.l.b16 %v43
    %v265 = vunpack.c.l.b16 %v44
    %v266 = vunpack.c.l.b16 %v45
    %v267 = vunpack.c.l.b16 %v46
    %v268 = vunpack.c.l.b16 %v47
    %v269 = vunpack.c.l.b16 %v48
    %v270 = vpack.c.b16 %v255, %v254
    %v271 = vpack.c.b16 %v257, %v256
    %v272 = vpack.c.b16 %v259, %v258
    %v273 = vpack.c.b16 %v261, %v260
    %v274 = vpack.c.b16 %v263, %v262
    %v275 = vpack.c.b16 %v265, %v264
    %v276 = vpack.c.b16 %v267, %v266
    %v277 = vpack.c.b16 %v269, %v268
    %286 = vmatpush.bf16.msra.mxu0 %v233
    %287 = vmatpush.bf16.msra.mxu0 %v232
    %288 = vmatpush.bf16.msra.mxu0 %v231
    %289 = vmatpush.bf16.msra.mxu0 %v230
    %290 = vmatpush.bf16.msra.mxu0 %v229
    %291 = vmatpush.bf16.msra.mxu0 %v228
    %292 = vmatpush.bf16.msra.mxu0 %v227
    %293 = vmatpush.bf16.msra.mxu0 %v226
    %294 = vmatmul.bf16.gmra.mxu0 %v270
    %v295 = vpop.f32.mrf.mxu0
    %v296 = vadd.f32 %v236, %v295
    %v297 = vpop.f32.mrf.mxu0
    %v298 = vadd.f32 %v236, %v297
    %299 = vmatmul.bf16.gmra.mxu0 %v271
    %v300 = vpop.f32.mrf.mxu0
    %v301 = vadd.f32 %v236, %v300
    %v302 = vpop.f32.mrf.mxu0
    %v303 = vadd.f32 %v236, %v302
    %304 = vmatmul.bf16.gmra.mxu0 %v272
    %v305 = vpop.f32.mrf.mxu0
    %v306 = vadd.f32 %v236, %v305
    %v307 = vpop.f32.mrf.mxu0
    %v308 = vadd.f32 %v236, %v307
    %309 = vmatmul.bf16.gmra.mxu0 %v273
    %v310 = vpop.f32.mrf.mxu0
    %v311 = vadd.f32 %v236, %v310
    %v312 = vpop.f32.mrf.mxu0
    %v313 = vadd.f32 %v236, %v312
    %314 = vmatmul.bf16.gmra.mxu0 %v274
    %v315 = vpop.f32.mrf.mxu0
    %v316 = vadd.f32 %v236, %v315
    %v317 = vpop.f32.mrf.mxu0
    %v318 = vadd.f32 %v236, %v317
    %319 = vmatmul.bf16.gmra.mxu0 %v275
    %v320 = vpop.f32.mrf.mxu0
    %v321 = vadd.f32 %v236, %v320
    %v322 = vpop.f32.mrf.mxu0
    %v323 = vadd.f32 %v236, %v322
    %324 = vmatmul.bf16.gmra.mxu0 %v276
    %v325 = vpop.f32.mrf.mxu0
    %v326 = vadd.f32 %v236, %v325
    %v327 = vpop.f32.mrf.mxu0
    %v328 = vadd.f32 %v236, %v327
    %329 = vmatmul.bf16.gmra.mxu0 %v277
    %v330 = vpop.f32.mrf.mxu0
    %v331 = vadd.f32 %v236, %v330
    %v332 = vpop.f32.mrf.mxu0
    %v333 = vadd.f32 %v236, %v332
    %334 = vdwg.mxu0
    %v335 = vmax.f32 %v296, 0.0
    %v336 = vmax.f32 %v298, 0.0
    %v337 = vmax.f32 %v301, 0.0
    %v338 = vmax.f32 %v303, 0.0
    %v339 = vmax.f32 %v306, 0.0
    %v340 = vmax.f32 %v308, 0.0
    %v341 = vmax.f32 %v311, 0.0
    %v342 = vmax.f32 %v313, 0.0
    %v343 = vmax.f32 %v316, 0.0
    %v344 = vmax.f32 %v318, 0.0
    %v345 = vmax.f32 %v321, 0.0
    %v346 = vmax.f32 %v323, 0.0
    %v347 = vmax.f32 %v326, 0.0
    %v348 = vmax.f32 %v328, 0.0
    %v349 = vmax.f32 %v331, 0.0
    %v350 = vmax.f32 %v333, 0.0
    %v351 = vpack.c.bf16 %v336, %v335
    %v352 = vpack.c.bf16 %v338, %v337
    %v353 = vpack.c.bf16 %v340, %v339
    %v354 = vpack.c.bf16 %v342, %v341
    %v355 = vpack.c.bf16 %v344, %v343
    %v356 = vpack.c.bf16 %v346, %v345
    %v357 = vpack.c.bf16 %v348, %v347
    %v358 = vpack.c.bf16 %v350, %v349
    %s359 = scalar_lea.vmem %s2, 64
    %v360 = vld [vmem:[%s359] sm:$0xf]
    %v361 = vld [vmem:[%s359 + $0x4] sm:$0xf]
    %v362 = vld [vmem:[%s359 + $0x8] sm:$0xf]
    %v363 = vld [vmem:[%s359 + $0xc] sm:$0xf]
    %v364 = vld [vmem:[%s359 + $0x10] sm:$0xf]
    %v365 = vld [vmem:[%s359 + $0x14] sm:$0xf]
    %v366 = vld [vmem:[%s359 + $0x18] sm:$0xf]
    %v367 = vld [vmem:[%s359 + $0x1c] sm:$0xf]
    %v368 = vld [vmem:[%s359 + $0x20] sm:$0xf]
    %v369 = vld [vmem:[%s359 + $0x24] sm:$0xf]
    %v370 = vld [vmem:[%s359 + $0x28] sm:$0xf]
    %v371 = vld [vmem:[%s359 + $0x2c] sm:$0xf]
    %v372 = vld [vmem:[%s359 + $0x30] sm:$0xf]
    %v373 = vld [vmem:[%s359 + $0x34] sm:$0xf]
    %v374 = vld [vmem:[%s359 + $0x38] sm:$0xf]
    %v375 = vld [vmem:[%s359 + $0x3c] sm:$0xf]
    %v392 = vunpack.c.l.b16 %v360
    %v393 = vunpack.c.l.b16 %v361
    %v394 = vunpack.c.l.b16 %v362
    %v395 = vunpack.c.l.b16 %v363
    %v396 = vunpack.c.l.b16 %v364
    %v397 = vunpack.c.l.b16 %v365
    %v398 = vunpack.c.l.b16 %v366
    %v399 = vunpack.c.l.b16 %v367
    %v400 = vunpack.c.l.b16 %v368
    %v401 = vunpack.c.l.b16 %v369
    %v402 = vunpack.c.l.b16 %v370
    %v403 = vunpack.c.l.b16 %v371
    %v404 = vunpack.c.l.b16 %v372
    %v405 = vunpack.c.l.b16 %v373
    %v406 = vunpack.c.l.b16 %v374
    %v407 = vunpack.c.l.b16 %v375
    %v408 = vpack.c.b16 %v393, %v392
    %v409 = vpack.c.b16 %v395, %v394
    %v410 = vpack.c.b16 %v397, %v396
    %v411 = vpack.c.b16 %v399, %v398
    %v412 = vpack.c.b16 %v401, %v400
    %v413 = vpack.c.b16 %v403, %v402
    %v414 = vpack.c.b16 %v405, %v404
    %v415 = vpack.c.b16 %v407, %v406
    %424 = vmatpush.bf16.msra.mxu0 %v415
    %425 = vmatpush.bf16.msra.mxu0 %v414
    %426 = vmatpush.bf16.msra.mxu0 %v413
    %427 = vmatpush.bf16.msra.mxu0 %v412
    %428 = vmatpush.bf16.msra.mxu0 %v411
    %429 = vmatpush.bf16.msra.mxu0 %v410
    %430 = vmatpush.bf16.msra.mxu0 %v409
    %431 = vmatpush.bf16.msra.mxu0 %v408
    %432 = vmatmul.bf16.gmra.mxu0 %v351
    %v433 = vpop.f32.mrf.mxu0
    %v434 = vadd.f32 0.0, %v433
    %v435 = vpop.f32.mrf.mxu0
    %v436 = vadd.f32 0.0, %v435
    %437 = vmatmul.bf16.gmra.mxu0 %v352
    %v438 = vpop.f32.mrf.mxu0
    %v439 = vadd.f32 0.0, %v438
    %v440 = vpop.f32.mrf.mxu0
    %v441 = vadd.f32 0.0, %v440
    %442 = vmatmul.bf16.gmra.mxu0 %v353
    %v443 = vpop.f32.mrf.mxu0
    %v444 = vadd.f32 0.0, %v443
    %v445 = vpop.f32.mrf.mxu0
    %v446 = vadd.f32 0.0, %v445
    %447 = vmatmul.bf16.gmra.mxu0 %v354
    %v448 = vpop.f32.mrf.mxu0
    %v449 = vadd.f32 0.0, %v448
    %v450 = vpop.f32.mrf.mxu0
    %v451 = vadd.f32 0.0, %v450
    %452 = vmatmul.bf16.gmra.mxu0 %v355
    %v453 = vpop.f32.mrf.mxu0
    %v454 = vadd.f32 0.0, %v453
    %v455 = vpop.f32.mrf.mxu0
    %v456 = vadd.f32 0.0, %v455
    %457 = vmatmul.bf16.gmra.mxu0 %v356
    %v458 = vpop.f32.mrf.mxu0
    %v459 = vadd.f32 0.0, %v458
    %v460 = vpop.f32.mrf.mxu0
    %v461 = vadd.f32 0.0, %v460
    %462 = vmatmul.bf16.gmra.mxu0 %v357
    %v463 = vpop.f32.mrf.mxu0
    %v464 = vadd.f32 0.0, %v463
    %v465 = vpop.f32.mrf.mxu0
    %v466 = vadd.f32 0.0, %v465
    %467 = vmatmul.bf16.gmra.mxu0 %v358
    %v468 = vpop.f32.mrf.mxu0
    %v469 = vadd.f32 0.0, %v468
    %v470 = vpop.f32.mrf.mxu0
    %v471 = vadd.f32 0.0, %v470
    %472 = vdwg.mxu0
    %v473 = vpack.c.bf16 %v436, %v434
    %v474 = vpack.c.bf16 %v441, %v439
    %v475 = vpack.c.bf16 %v446, %v444
    %v476 = vpack.c.bf16 %v451, %v449
    %v477 = vpack.c.bf16 %v456, %v454
    %v478 = vpack.c.bf16 %v461, %v459
    %v479 = vpack.c.bf16 %v466, %v464
    %v480 = vpack.c.bf16 %v471, %v469
    %s481 = scalar_lea.vmem %s3, 1
    %v482 = vld [vmem:[%s481] sm:$0x1]
    %v484 = vperm.slane %v482, 0
    %486 = vmatpush.bf16.msra.mxu0 %v480
    %487 = vmatpush.bf16.msra.mxu0 %v479
    %488 = vmatpush.bf16.msra.mxu0 %v478
    %489 = vmatpush.bf16.msra.mxu0 %v477
    %490 = vmatpush.bf16.msra.mxu0 %v476
    %491 = vmatpush.bf16.msra.mxu0 %v475
    %492 = vmatpush.bf16.msra.mxu0 %v474
    %493 = vmatpush.bf16.msra.mxu0 %v473
    %494 = vmatmul.bf16.gmra.mxu0 %v270
    %v495 = vpop.f32.mrf.mxu0
    %v496 = vadd.f32 %v484, %v495
    %v497 = vpop.f32.mrf.mxu0
    %v498 = vadd.f32 %v484, %v497
    %499 = vmatmul.bf16.gmra.mxu0 %v271
    %v500 = vpop.f32.mrf.mxu0
    %v501 = vadd.f32 %v484, %v500
    %v502 = vpop.f32.mrf.mxu0
    %v503 = vadd.f32 %v484, %v502
    %504 = vmatmul.bf16.gmra.mxu0 %v272
    %v505 = vpop.f32.mrf.mxu0
    %v506 = vadd.f32 %v484, %v505
    %v507 = vpop.f32.mrf.mxu0
    %v508 = vadd.f32 %v484, %v507
    %509 = vmatmul.bf16.gmra.mxu0 %v273
    %v510 = vpop.f32.mrf.mxu0
    %v511 = vadd.f32 %v484, %v510
    %v512 = vpop.f32.mrf.mxu0
    %v513 = vadd.f32 %v484, %v512
    %514 = vmatmul.bf16.gmra.mxu0 %v274
    %v515 = vpop.f32.mrf.mxu0
    %v516 = vadd.f32 %v484, %v515
    %v517 = vpop.f32.mrf.mxu0
    %v518 = vadd.f32 %v484, %v517
    %519 = vmatmul.bf16.gmra.mxu0 %v275
    %v520 = vpop.f32.mrf.mxu0
    %v521 = vadd.f32 %v484, %v520
    %v522 = vpop.f32.mrf.mxu0
    %v523 = vadd.f32 %v484, %v522
    %524 = vmatmul.bf16.gmra.mxu0 %v276
    %v525 = vpop.f32.mrf.mxu0
    %v526 = vadd.f32 %v484, %v525
    %v527 = vpop.f32.mrf.mxu0
    %v528 = vadd.f32 %v484, %v527
    %529 = vmatmul.bf16.gmra.mxu0 %v277
    %v530 = vpop.f32.mrf.mxu0
    %v531 = vadd.f32 %v484, %v530
    %v532 = vpop.f32.mrf.mxu0
    %v533 = vadd.f32 %v484, %v532
    %534 = vdwg.mxu0
    %v535 = vmax.f32 %v496, 0.0
    %v536 = vmax.f32 %v498, 0.0
    %v537 = vmax.f32 %v501, 0.0
    %v538 = vmax.f32 %v503, 0.0
    %v539 = vmax.f32 %v506, 0.0
    %v540 = vmax.f32 %v508, 0.0
    %v541 = vmax.f32 %v511, 0.0
    %v542 = vmax.f32 %v513, 0.0
    %v543 = vmax.f32 %v516, 0.0
    %v544 = vmax.f32 %v518, 0.0
    %v545 = vmax.f32 %v521, 0.0
    %v546 = vmax.f32 %v523, 0.0
    %v547 = vmax.f32 %v526, 0.0
    %v548 = vmax.f32 %v528, 0.0
    %v549 = vmax.f32 %v531, 0.0
    %v550 = vmax.f32 %v533, 0.0
    %v551 = vpack.c.bf16 %v536, %v535
    %v552 = vpack.c.bf16 %v538, %v537
    %v553 = vpack.c.bf16 %v540, %v539
    %v554 = vpack.c.bf16 %v542, %v541
    %v555 = vpack.c.bf16 %v544, %v543
    %v556 = vpack.c.bf16 %v546, %v545
    %v557 = vpack.c.bf16 %v548, %v547
    %v558 = vpack.c.bf16 %v550, %v549
    %s559 = scalar_lea.vmem %s2, 128
    %v560 = vld [vmem:[%s559] sm:$0xf]
    %v561 = vld [vmem:[%s559 + $0x4] sm:$0xf]
    %v562 = vld [vmem:[%s559 + $0x8] sm:$0xf]
    %v563 = vld [vmem:[%s559 + $0xc] sm:$0xf]
    %v564 = vld [vmem:[%s559 + $0x10] sm:$0xf]
    %v565 = vld [vmem:[%s559 + $0x14] sm:$0xf]
    %v566 = vld [vmem:[%s559 + $0x18] sm:$0xf]
    %v567 = vld [vmem:[%s559 + $0x1c] sm:$0xf]
    %v568 = vld [vmem:[%s559 + $0x20] sm:$0xf]
    %v569 = vld [vmem:[%s559 + $0x24] sm:$0xf]
    %v570 = vld [vmem:[%s559 + $0x28] sm:$0xf]
    %v571 = vld [vmem:[%s559 + $0x2c] sm:$0xf]
    %v572 = vld [vmem:[%s559 + $0x30] sm:$0xf]
    %v573 = vld [vmem:[%s559 + $0x34] sm:$0xf]
    %v574 = vld [vmem:[%s559 + $0x38] sm:$0xf]
    %v575 = vld [vmem:[%s559 + $0x3c] sm:$0xf]
    %v592 = vunpack.c.l.b16 %v560
    %v593 = vunpack.c.l.b16 %v561
    %v594 = vunpack.c.l.b16 %v562
    %v595 = vunpack.c.l.b16 %v563
    %v596 = vunpack.c.l.b16 %v564
    %v597 = vunpack.c.l.b16 %v565
    %v598 = vunpack.c.l.b16 %v566
    %v599 = vunpack.c.l.b16 %v567
    %v600 = vunpack.c.l.b16 %v568
    %v601 = vunpack.c.l.b16 %v569
    %v602 = vunpack.c.l.b16 %v570
    %v603 = vunpack.c.l.b16 %v571
    %v604 = vunpack.c.l.b16 %v572
    %v605 = vunpack.c.l.b16 %v573
    %v606 = vunpack.c.l.b16 %v574
    %v607 = vunpack.c.l.b16 %v575
    %v608 = vpack.c.b16 %v593, %v592
    %v609 = vpack.c.b16 %v595, %v594
    %v610 = vpack.c.b16 %v597, %v596
    %v611 = vpack.c.b16 %v599, %v598
    %v612 = vpack.c.b16 %v601, %v600
    %v613 = vpack.c.b16 %v603, %v602
    %v614 = vpack.c.b16 %v605, %v604
    %v615 = vpack.c.b16 %v607, %v606
    %624 = vmatpush.bf16.msra.mxu0 %v615
    %625 = vmatpush.bf16.msra.mxu0 %v614
    %626 = vmatpush.bf16.msra.mxu0 %v613
    %627 = vmatpush.bf16.msra.mxu0 %v612
    %628 = vmatpush.bf16.msra.mxu0 %v611
    %629 = vmatpush.bf16.msra.mxu0 %v610
    %630 = vmatpush.bf16.msra.mxu0 %v609
    %631 = vmatpush.bf16.msra.mxu0 %v608
    %632 = vmatmul.bf16.gmra.mxu0 %v551
    %v633 = vpop.f32.mrf.mxu0
    %v634 = vadd.f32 0.0, %v633
    %v635 = vpop.f32.mrf.mxu0
    %v636 = vadd.f32 0.0, %v635
    %637 = vmatmul.bf16.gmra.mxu0 %v552
    %v638 = vpop.f32.mrf.mxu0
    %v639 = vadd.f32 0.0, %v638
    %v640 = vpop.f32.mrf.mxu0
    %v641 = vadd.f32 0.0, %v640
    %642 = vmatmul.bf16.gmra.mxu0 %v553
    %v643 = vpop.f32.mrf.mxu0
    %v644 = vadd.f32 0.0, %v643
    %v645 = vpop.f32.mrf.mxu0
    %v646 = vadd.f32 0.0, %v645
    %647 = vmatmul.bf16.gmra.mxu0 %v554
    %v648 = vpop.f32.mrf.mxu0
    %v649 = vadd.f32 0.0, %v648
    %v650 = vpop.f32.mrf.mxu0
    %v651 = vadd.f32 0.0, %v650
    %652 = vmatmul.bf16.gmra.mxu0 %v555
    %v653 = vpop.f32.mrf.mxu0
    %v654 = vadd.f32 0.0, %v653
    %v655 = vpop.f32.mrf.mxu0
    %v656 = vadd.f32 0.0, %v655
    %657 = vmatmul.bf16.gmra.mxu0 %v556
    %v658 = vpop.f32.mrf.mxu0
    %v659 = vadd.f32 0.0, %v658
    %v660 = vpop.f32.mrf.mxu0
    %v661 = vadd.f32 0.0, %v660
    %662 = vmatmul.bf16.gmra.mxu0 %v557
    %v663 = vpop.f32.mrf.mxu0
    %v664 = vadd.f32 0.0, %v663
    %v665 = vpop.f32.mrf.mxu0
    %v666 = vadd.f32 0.0, %v665
    %667 = vmatmul.bf16.gmra.mxu0 %v558
    %v668 = vpop.f32.mrf.mxu0
    %v669 = vadd.f32 0.0, %v668
    %v670 = vpop.f32.mrf.mxu0
    %v671 = vadd.f32 0.0, %v670
    %672 = vdwg.mxu0
    %v673 = vpack.c.bf16 %v636, %v634
    %v674 = vpack.c.bf16 %v641, %v639
    %v675 = vpack.c.bf16 %v646, %v644
    %v676 = vpack.c.bf16 %v651, %v649
    %v677 = vpack.c.bf16 %v656, %v654
    %v678 = vpack.c.bf16 %v661, %v659
    %v679 = vpack.c.bf16 %v666, %v664
    %v680 = vpack.c.bf16 %v671, %v669
    %s681 = scalar_lea.vmem %s3, 2
    %v682 = vld [vmem:[%s681] sm:$0x1]
    %v684 = vperm.slane %v682, 0
    %686 = vmatpush.bf16.msra.mxu0 %v680
    %687 = vmatpush.bf16.msra.mxu0 %v679
    %688 = vmatpush.bf16.msra.mxu0 %v678
    %689 = vmatpush.bf16.msra.mxu0 %v677
    %690 = vmatpush.bf16.msra.mxu0 %v676
    %691 = vmatpush.bf16.msra.mxu0 %v675
    %692 = vmatpush.bf16.msra.mxu0 %v674
    %693 = vmatpush.bf16.msra.mxu0 %v673
    %694 = vmatmul.bf16.gmra.mxu0 %v270
    %v695 = vpop.f32.mrf.mxu0
    %v696 = vadd.f32 %v684, %v695
    %v697 = vpop.f32.mrf.mxu0
    %v698 = vadd.f32 %v684, %v697
    %699 = vmatmul.bf16.gmra.mxu0 %v271
    %v700 = vpop.f32.mrf.mxu0
    %v701 = vadd.f32 %v684, %v700
    %v702 = vpop.f32.mrf.mxu0
    %v703 = vadd.f32 %v684, %v702
    %704 = vmatmul.bf16.gmra.mxu0 %v272
    %v705 = vpop.f32.mrf.mxu0
    %v706 = vadd.f32 %v684, %v705
    %v707 = vpop.f32.mrf.mxu0
    %v708 = vadd.f32 %v684, %v707
    %709 = vmatmul.bf16.gmra.mxu0 %v273
    %v710 = vpop.f32.mrf.mxu0
    %v711 = vadd.f32 %v684, %v710
    %v712 = vpop.f32.mrf.mxu0
    %v713 = vadd.f32 %v684, %v712
    %714 = vmatmul.bf16.gmra.mxu0 %v274
    %v715 = vpop.f32.mrf.mxu0
    %v716 = vadd.f32 %v684, %v715
    %v717 = vpop.f32.mrf.mxu0
    %v718 = vadd.f32 %v684, %v717
    %719 = vmatmul.bf16.gmra.mxu0 %v275
    %v720 = vpop.f32.mrf.mxu0
    %v721 = vadd.f32 %v684, %v720
    %v722 = vpop.f32.mrf.mxu0
    %v723 = vadd.f32 %v684, %v722
    %724 = vmatmul.bf16.gmra.mxu0 %v276
    %v725 = vpop.f32.mrf.mxu0
    %v726 = vadd.f32 %v684, %v725
    %v727 = vpop.f32.mrf.mxu0
    %v728 = vadd.f32 %v684, %v727
    %729 = vmatmul.bf16.gmra.mxu0 %v277
    %v730 = vpop.f32.mrf.mxu0
    %v731 = vadd.f32 %v684, %v730
    %v732 = vpop.f32.mrf.mxu0
    %v733 = vadd.f32 %v684, %v732
    %734 = vdwg.mxu0
    %735 = vst [vmem:[%s4] sm:$0xff] %v696
    %736 = vst [vmem:[%s4 + $0x8] sm:$0xff] %v698
    %737 = vst [vmem:[%s4 + $0x10] sm:$0xff] %v701
    %738 = vst [vmem:[%s4 + $0x18] sm:$0xff] %v703
    %739 = vst [vmem:[%s4 + $0x20] sm:$0xff] %v706
    %740 = vst [vmem:[%s4 + $0x28] sm:$0xff] %v708
    %741 = vst [vmem:[%s4 + $0x30] sm:$0xff] %v711
    %742 = vst [vmem:[%s4 + $0x38] sm:$0xff] %v713
    %743 = vst [vmem:[%s4 + $0x40] sm:$0xff] %v716
    %744 = vst [vmem:[%s4 + $0x48] sm:$0xff] %v718
    %745 = vst [vmem:[%s4 + $0x50] sm:$0xff] %v721
    %746 = vst [vmem:[%s4 + $0x58] sm:$0xff] %v723
    %747 = vst [vmem:[%s4 + $0x60] sm:$0xff] %v726
    %748 = vst [vmem:[%s4 + $0x68] sm:$0xff] %v728
    %749 = vst [vmem:[%s4 + $0x70] sm:$0xff] %v731
    %750 = vst [vmem:[%s4 + $0x78] sm:$0xff] %v733
    // Predicated region
    $region22: #{_lambda_.1} parent=1 // pred_check
      _
    $region23: #{_lambda_.1} parent=1 // pred_check_branch
      %752 = sbr.rel (0) target = $region25
    $region24: #{_lambda_.1} parent=1 // pred_region
      _
    $region25: #{_lambda_.1} parent=1 // pred_fallthru
      _
    // Predicated region
    $region26: #{_lambda_.1} parent=1 // pred_check
      _
    $region27: #{_lambda_.1} parent=1 // pred_check_branch
      %754 = sbr.rel (0) target = $region29
    $region28: #{_lambda_.1} parent=1 // pred_region
      _
    $region29: #{_lambda_.1} parent=1 // pred_fallthru
      _
    %755 = vsyncpa [#allocation3], 1

</llo_original>
